<compile_context>
chip_gen: v7x
topology: tpu7x:2x2x1
jax: 0.10.0
libtpu: 0.0.40
codegen_flags: <defaults>
</compile_context>

<pallas_src>
import jax
import jax.numpy as jnp
from jax.experimental import pallas as pl
from jax.experimental.pallas import tpu as pltpu


def _stat_embed_kernel(code_ref, w_ref, b_ref, out_ref):
    # out = code @ W_eff + bias   (f32 operands, f32 MXU accumulation)
    acc = jnp.dot(code_ref[...], w_ref[...], preferred_element_type=jnp.float32)
    out_ref[...] = (acc + b_ref[...]).astype(out_ref.dtype)


def precompute_stat_embed_params(embed_table, fc_w, fc_b):
    """One-time parameter fold — call ONCE, not per forward.

    W_eff[v, l] = sum_e emb[v, e] * fc_w[l, v*E + e]   -> (V, L)  (f32)
    bias2d      = fc_b.reshape(1, L)                   -> (1, L)  (f32)

    Exact algebra of the PyTorch forward; the contraction over E is tiny so it
    runs at HIGHEST precision.  Reads fc_w once in its natural (L, K) layout.
    """
    L, K = fc_w.shape
    V, E = embed_table.shape
    assert K == V * E
    w3 = fc_w.reshape(L, V, E).astype(jnp.float32)
    w_eff = jnp.einsum(
        "lve,ve->vl", w3, embed_table.astype(jnp.float32),
        precision=jax.lax.Precision.HIGHEST,
    )
    bias2d = fc_b.reshape(1, L).astype(jnp.float32)
    return w_eff, bias2d


def _vmem_capacity_bytes():
    # Generation-aware VMEM budget (v5e/v6e: 128 MiB, v7x: 64 MiB per TC).
    try:
        return int(pltpu.get_tpu_info().vmem_capacity_bytes)
    except Exception:  # conservative fallback = v7x per-TC capacity
        return 64 * 1024 * 1024


def stat_embed_forward(code, w_eff, bias2d, *, tl=None):
    """Hot path only: code (B, V) f32, w_eff (V, L) f32, bias2d (1, L) f32 -> (B, L) f32."""
    B, V = code.shape
    Vt, L = w_eff.shape
    assert Vt == V and bias2d.shape == (1, L)

    code = code.astype(jnp.float32)
    w_eff = w_eff.astype(jnp.float32)
    bias2d = bias2d.astype(jnp.float32)
    out_shape = jax.ShapeDtypeStruct((B, L), jnp.float32)

    # ---- Small-shape path: zero grid, whole operands resident in VMEM. ----
    total_bytes = 4 * (B * V + V * L + L + B * L)
    if tl is None and total_bytes <= 8 * 1024 * 1024:
        vmem = pl.BlockSpec(memory_space=pltpu.MemorySpace.VMEM)
        return pl.pallas_call(
            _stat_embed_kernel,
            out_shape=out_shape,
            in_specs=[vmem, vmem, vmem],
            out_specs=vmem,
        )(code, w_eff, bias2d)

    # ---- Large-L path: lane-dense L tiling, VMEM-budget-derived tile. ----
    if tl is None:
        budget = _vmem_capacity_bytes() // 4          # generous headroom
        # double-buffered W_eff tile dominates VMEM: 2 * V * tl * 4 bytes
        tl_cap = max(128, ((budget // (2 * V * 4)) // 128) * 128)
        tl = min(L, tl_cap, 2048)
        while L % tl != 0 and tl > 128:
            tl //= 2
    assert L % tl == 0 and (tl == L or tl % 128 == 0)
    grid = (L // tl,)

    return pl.pallas_call(
        _stat_embed_kernel,
        out_shape=out_shape,
        grid_spec=pltpu.PrefetchScalarGridSpec(
            num_scalar_prefetch=0,
            grid=grid,
            in_specs=[
                # code: constant index_map over the grid -> resident, single buffer.
                pl.BlockSpec((B, V), lambda j: (0, 0), pipeline_mode=pl.Buffered(1)),
                pl.BlockSpec((V, tl), lambda j: (0, j)),   # streamed weight tile
                pl.BlockSpec((1, tl), lambda j: (0, j)),   # tiny bias tile
            ],
            out_specs=pl.BlockSpec((B, tl), lambda j: (0, j)),  # lane-dense output
        ),
        compiler_params=pltpu.CompilerParams(
            # >=2 independent L tiles shard across v7x's two TensorCores.
            dimension_semantics=("parallel",),
        ),
    )(code, w_eff, bias2d)


if __name__ == "__main__":
    # Small shapes consistent with the module:
    B = 8      # batch
    V = 16     # code_vocab_size (== code.shape[1])
    E = 8      # embed_size
    L = 256    # latent_size
    K = V * E  # fc input features

    key = jax.random.PRNGKey(0)
    k_code, k_emb, k_w, k_b = jax.random.split(key, 4)

    # Deterministic synthetic inputs / parameters (shapes from __init__).
    code = jax.random.uniform(k_code, (B, V), dtype=jnp.float32)           # multi-hot-ish codes
    embed_table = jax.random.normal(k_emb, (V, E), dtype=jnp.float32)      # nn.Embedding weight
    fc_w = jax.random.normal(k_w, (L, K), dtype=jnp.float32) * (1.0 / K)   # nn.Linear weight
    fc_b = jax.random.normal(k_b, (L,), dtype=jnp.float32) * 0.1           # nn.Linear bias

    # One-time parameter fold (NOT part of the per-call hot path).
    w_eff, bias2d = precompute_stat_embed_params(embed_table, fc_w, fc_b)
    w_eff = jax.block_until_ready(w_eff)

    forward = jax.jit(stat_embed_forward)
    out = jax.block_until_ready(forward(code, w_eff, bias2d))

    # Pure-JAX f32 reference of the PyTorch forward.
    ref = (code[:, :, None] * embed_table[None, :, :]).reshape(B, K) @ fc_w.T + fc_b

    assert out.shape == (B, L) and out.dtype == jnp.float32
    max_err = float(jnp.max(jnp.abs(out - ref)))
    assert jnp.allclose(out, ref, atol=1e-4, rtol=1e-4), f"max abs err {max_err}"

    print("KERNEL_OK")
</pallas_src>

<mosaic_0001>
module attributes {stable_mosaic.version = 11 : i64} {
  func.func @_stat_embed_kernel(%arg0: memref<8x16xf32, #tpu.memory_space<vmem>>, %arg1: memref<16x256xf32, #tpu.memory_space<vmem>>, %arg2: memref<1x256xf32, #tpu.memory_space<vmem>>, %arg3: memref<8x256xf32, #tpu.memory_space<vmem>>) attributes {dimension_semantics = [], scalar_prefetch = 0 : i64, scratch_operands = 0 : i64, tpu.core_type = #tpu.core_type<tc>} {
    %c0 = arith.constant 0 : index
    %c0_0 = arith.constant 0 : index
    %0 = vector.load %arg0[%c0, %c0_0] : memref<8x16xf32, #tpu.memory_space<vmem>>, vector<8x16xf32>
    %c0_1 = arith.constant 0 : index
    %c0_2 = arith.constant 0 : index
    %1 = vector.load %arg1[%c0_1, %c0_2] : memref<16x256xf32, #tpu.memory_space<vmem>>, vector<16x256xf32>
    %cst = arith.constant dense<0.000000e+00> : vector<8x256xf32>
    %2 = tpu.matmul %0, %1, %cst {dimension_numbers = #tpu.dot_dimension_numbers<[1], [0], [0], [1], [0, 0, 1, 1], [], []>} : vector<8x16xf32>, vector<16x256xf32>, vector<8x256xf32> -> vector<8x256xf32>
    %c0_3 = arith.constant 0 : index
    %c0_4 = arith.constant 0 : index
    %3 = vector.load %arg2[%c0_3, %c0_4] : memref<1x256xf32, #tpu.memory_space<vmem>>, vector<1x256xf32>
    %4 = vector.broadcast %3 : vector<1x256xf32> to vector<8x256xf32>
    %5 = arith.addf %2, %4 : vector<8x256xf32>
    %c0_5 = arith.constant 0 : index
    %c0_6 = arith.constant 0 : index
    %6 = vector.load %arg3[%c0_5, %c0_6] : memref<8x256xf32, #tpu.memory_space<vmem>>, vector<8x256xf32>
    tpu.vector_store %arg3[%c0_5, %c0_6], %5 {strides = array<i32>} : memref<8x256xf32, #tpu.memory_space<vmem>>, vector<8x256xf32>,
    return
  }
}

</mosaic_0001>

<llo_original>
// kernel: stat_embed_forward.1
$region0: #{stat_embed_forward.1}
  #allocation0 [shape = 'u32[]', space=smem, size = 0x4, offset = 0x4, fixed_abs, tag = 'smem constant byte address 0x4 - core index']
  #allocation1 [shape = 'u32[144,128]{1,0:T(1,128)}', space=vmem, size = 0x12000, scoped, tag = 'internal scratch']
  %s0 = inlined_call_operand.hbm [shape: f32[8,16], index: 0, kind: input, shape index: {}]
  %s1 = inlined_call_operand.hbm [shape: f32[16,256], index: 1, kind: input, shape index: {}]
  %s2 = inlined_call_operand.vmem [shape: f32[1,256], index: 2, kind: input, shape index: {}]
  %s3 = inlined_call_operand.hbm [shape: f32[8,256], index: 3, kind: output, shape index: {}]
  %s4 = sld [smem:[#allocation0]]
  $region30: #{stat_embed_forward.1} parent=0
    _
  %s6 = ssub.s32 1, %s4
  %s7 = scalar_select 0, %s6, %s4
  $region1: #{stat_embed_forward.1} parent=0
    #allocation2 [shape = 'u8[4096]{0}', space=vmem, size = 0x1000, scoped, tag = 'input window, operand 0, single buffered']
    #allocation3 [shape = 's32[1]{0}', space=sflag, size = 0x4, scoped, tag = 'scoped memory for stat_embed_forward.1']
    #allocation4 [shape = 's32[1]{0}', space=sflag, size = 0x4, scoped, tag = 'scoped memory for stat_embed_forward.1']
    #allocation5 [shape = 'u8[16384]{0}', space=vmem, size = 0x4000, scoped, tag = 'input window, operand 1, single buffered']
    #allocation6 [shape = 's32[1]{0}', space=sflag, size = 0x4, scoped, tag = 'scoped memory for stat_embed_forward.1']
    #allocation7 [shape = 'u8[8192]{0}', space=vmem, size = 0x2000, scoped, tag = 'output window, operand 0, single buffered']
    %8 = vsyncpa [#allocation3], 0
    %9 = vsyncpa [#allocation6], 0
    %10 = vsyncpa [#allocation4], 0
    // Predicated region
    $region2: #{stat_embed_forward.1} parent=1 // pred_check
      _
    $region3: #{stat_embed_forward.1} parent=1 // pred_check_branch
      %12 = sbr.rel (0) target = $region5
    $region4: #{stat_embed_forward.1} parent=1 // pred_region
      %s14 = ssub.s32 128, 128
      %15 = vsyncadd [#allocation3], %s14
      %s17 = sshll.u32 [#allocation2], 4
      %s18 = int_to_ptr.vmem [resolvable:$true] %s17
      %20 = dma.hbm_to_vmem [thread:$0]  %s0, 128, %s18, [#allocation3]
    $region5: #{stat_embed_forward.1} parent=1 // pred_fallthru
      _
    // Predicated region
    $region6: #{stat_embed_forward.1} parent=1 // pred_check
      _
    $region7: #{stat_embed_forward.1} parent=1 // pred_check_branch
      %22 = sbr.rel (0) target = $region9
    $region8: #{stat_embed_forward.1} parent=1 // pred_region
      %s24 = ssub.s32 512, 512
      %25 = vsyncadd [#allocation6], %s24
      %s26 = sshll.u32 [#allocation5], 4
      %s27 = int_to_ptr.vmem [resolvable:$true] %s26
      %32 = dma.hbm_to_vmem [thread:$0]  %s1, 512, %s27, [#allocation6], 256, 256, 16
    $region9: #{stat_embed_forward.1} parent=1 // pred_fallthru
      _
    // Predicated region
    $region10: #{stat_embed_forward.1} parent=1 // pred_check
      _
    $region11: #{stat_embed_forward.1} parent=1 // pred_check_branch
      %34 = sbr.rel (0) target = $region13
    $region12: #{stat_embed_forward.1} parent=1 // pred_region
      _
    $region13: #{stat_embed_forward.1} parent=1 // pred_fallthru
      _
    // Predicated region
    $region14: #{stat_embed_forward.1} parent=1 // pred_check
      _
    $region15: #{stat_embed_forward.1} parent=1 // pred_check_branch
      %36 = sbr.rel (0) target = $region17
    $region16: #{stat_embed_forward.1} parent=1 // pred_region
      %37 = dma.done [#allocation3], 128
    $region17: #{stat_embed_forward.1} parent=1 // pred_fallthru
      _
    // Predicated region
    $region18: #{stat_embed_forward.1} parent=1 // pred_check
      _
    $region19: #{stat_embed_forward.1} parent=1 // pred_check_branch
      %39 = sbr.rel (0) target = $region21
    $region20: #{stat_embed_forward.1} parent=1 // pred_region
      %40 = dma.done [#allocation6], 512
    $region21: #{stat_embed_forward.1} parent=1 // pred_fallthru
      _
    %v41 = vld [vmem:[#allocation2] sm:$0xff]
    %v42 = vld [vmem:[#allocation5] sm:$0xff]
    %v43 = vld [vmem:[#allocation5 + $0x8] sm:$0xff]
    %v44 = vld [vmem:[#allocation5 + $0x10] sm:$0xff]
    %v45 = vld [vmem:[#allocation5 + $0x18] sm:$0xff]
    %v46 = vld [vmem:[%s2] sm:$0x3]
    %v48 = vlaneseq
    %v49 = vshrl.u32 %v48, 7
    %v50 = vsub.s32 0, %v49
    %v51 = vrot.slane %v46, %v50
    %v52 = vlaneseq
    %v53 = vshrl.u32 %v52, 7
    %v54 = vsub.s32 1, %v53
    %v55 = vrot.slane %v46, %v54
    %vm58 = vcmask 130048
    %v60 = vsel %vm58, %v41, 0
    %62 = vmatprep.subr.mxu0 %v43
    %63 = vmatpush1.msra.mxu0 %v42
    %64 = vmatprep.subr.mxu0 %v45
    %65 = vmatpush1.msra.mxu0 %v44
    %66 = vmatprep.subr.mxu0 0.0
    %67 = vmatpush1.msra.mxu0 0.0
    %68 = vmatprep.subr.mxu0 0.0
    %69 = vmatpush1.msra.mxu0 0.0
    %70 = vmatprep.subr.mxu0 0.0
    %71 = vmatpush1.msra.mxu0 0.0
    %72 = vmatprep.subr.mxu0 0.0
    %73 = vmatpush1.msra.mxu0 0.0
    %74 = vmatprep.subr.mxu0 0.0
    %75 = vmatpush1.msra.mxu0 0.0
    %76 = vmatprep.subr.mxu0 0.0
    %77 = vmatpush1.msra.mxu0 0.0
    %78 = vmatprep.subr.mxu0 0.0
    %79 = vmatpush1.msra.mxu0 0.0
    %80 = vmatprep.subr.mxu0 0.0
    %81 = vmatpush1.msra.mxu0 0.0
    %82 = vmatprep.subr.mxu0 0.0
    %83 = vmatpush1.msra.mxu0 0.0
    %84 = vmatprep.subr.mxu0 0.0
    %85 = vmatpush1.msra.mxu0 0.0
    %86 = vmatprep.subr.mxu0 0.0
    %87 = vmatpush1.msra.mxu0 0.0
    %88 = vmatprep.subr.mxu0 0.0
    %89 = vmatpush1.msra.mxu0 0.0
    %90 = vmatprep.subr.mxu0 0.0
    %91 = vmatpush1.msra.mxu0 0.0
    %92 = vmatprep.subr.mxu0 0.0
    %93 = vmatpush1.msra.mxu0 0.0
    %94 = vmatprep.subr.mxu0 0.0
    %95 = vmatpush1.msra.mxu0 0.0
    %96 = vmatprep.subr.mxu0 0.0
    %97 = vmatpush1.msra.mxu0 0.0
    %98 = vmatprep.subr.mxu0 0.0
    %99 = vmatpush1.msra.mxu0 0.0
    %100 = vmatprep.subr.mxu0 0.0
    %101 = vmatpush1.msra.mxu0 0.0
    %102 = vmatprep.subr.mxu0 0.0
    %103 = vmatpush1.msra.mxu0 0.0
    %104 = vmatprep.subr.mxu0 0.0
    %105 = vmatpush1.msra.mxu0 0.0
    %106 = vmatprep.subr.mxu0 0.0
    %107 = vmatpush1.msra.mxu0 0.0
    %108 = vmatprep.subr.mxu0 0.0
    %109 = vmatpush1.msra.mxu0 0.0
    %110 = vmatprep.subr.mxu0 0.0
    %111 = vmatpush1.msra.mxu0 0.0
    %112 = vmatprep.subr.mxu0 0.0
    %113 = vmatpush1.msra.mxu0 0.0
    %114 = vmatprep.subr.mxu0 0.0
    %115 = vmatpush1.msra.mxu0 0.0
    %116 = vmatprep.subr.mxu0 0.0
    %117 = vmatpush1.msra.mxu0 0.0
    %118 = vmatprep.subr.mxu0 0.0
    %119 = vmatpush1.msra.mxu0 0.0
    %120 = vmatprep.subr.mxu0 0.0
    %121 = vmatpush1.msra.mxu0 0.0
    %122 = vmatprep.subr.mxu0 0.0
    %123 = vmatpush1.msra.mxu0 0.0
    %124 = vmatprep.subr.mxu0 0.0
    %125 = vmatpush1.msra.mxu0 0.0
    %126 = vmatprep.mubr.f32.mxu0 0.0
    %127 = vmatmul.mubr.f32.gmra.mrb[0].mxu0 %v60
    %v128 = vpop.f32.mrb[0].mxu0
    %v129 = vadd.f32 %v51, %v128
    %v130 = vpop.f32.mrb[0].mxu0
    %v131 = vadd.f32 %v55, %v130
    %132 = vdwg.mxu0
    %133 = vst [vmem:[#allocation7] sm:$0xff] %v129
    %134 = vst [vmem:[#allocation7 + $0x8] sm:$0xff] %v131
    // Predicated region
    $region22: #{stat_embed_forward.1} parent=1 // pred_check
      _
    $region23: #{stat_embed_forward.1} parent=1 // pred_check_branch
      %136 = sbr.rel (0) target = $region25
    $region24: #{stat_embed_forward.1} parent=1 // pred_region
      %s138 = ssub.s32 256, 256
      %139 = vsyncadd [#allocation4], %s138
      %s141 = sshll.u32 [#allocation7], 4
      %s142 = int_to_ptr.vmem [resolvable:$true] %s141
      %144 = dma.vmem_to_hbm [thread:$0]  %s142, 256, %s3, [#allocation4]
    $region25: #{stat_embed_forward.1} parent=1 // pred_fallthru
      _
    // Predicated region
    $region26: #{stat_embed_forward.1} parent=1 // pred_check
      _
    $region27: #{stat_embed_forward.1} parent=1 // pred_check_branch
      %146 = sbr.rel (0) target = $region29
    $region28: #{stat_embed_forward.1} parent=1 // pred_region
      %147 = dma.done [#allocation4], 256
    $region29: #{stat_embed_forward.1} parent=1 // pred_fallthru
      _
    %148 = vsyncpa [#allocation3], 1
    %149 = vsyncpa [#allocation6], 1
    %150 = vsyncpa [#allocation4], 1

</llo_original>
